<compile_context>
chip_gen: v5e
topology: v5e:2x2
jax: 0.10.0
libtpu: 0.0.40
codegen_flags: <defaults>
</compile_context>

<pallas_src>
import math

import jax
import jax.numpy as jnp
from jax import lax
from jax.experimental import pallas as pl
from jax.experimental.pallas import tpu as pltpu

# --------------------------- small synthetic config -------------------------
BATCH = 2
CHAN = 4
SIZE = 16                     # height == width == SIZE (power of two)
NHEADS = 2
HEADLEN = CHAN // NHEADS
CLIP_EMBLEN = 32
HW = SIZE * SIZE
EPS = 1e-5                    # GroupNorm eps (PyTorch default)
NEG_BIG = -1e30               # finite "-inf" for the cross-head mask
SCALE = 1.0 / math.sqrt(HW)   # F.scaled_dot_product_attention default scale

assert SIZE & (SIZE - 1) == 0, "in-kernel border mask uses p & (SIZE-1)"


# ------------------------------ kernel helpers -------------------------------
def _rows_norm(x):
    """Per-row normalization over the lane (spatial) axis == GroupNorm with one
    channel per group.  Uses two independent lane reductions (sum, sum of
    squares); var = E[x^2] - mean^2 is less stable than the centered form but
    values here are O(1)."""
    inv_n = 1.0 / x.shape[-1]
    mean = jnp.sum(x, axis=-1, keepdims=True) * inv_n
    ex2 = jnp.sum(x * x, axis=-1, keepdims=True) * inv_n
    var = ex2 - mean * mean
    return (x - mean) * lax.rsqrt(var + EPS)


# ------------------------------ fused kernel ---------------------------------
def _fused_kernel(cs_ref, emb_ref, wclip_ref, bclip_ref, x_ref,
                  wqkv_ref, aux_ref, out_ref, src_scr, col_scr):
    b = pl.program_id(0)

    aux = aux_ref[...]                                   # (C, 4 + C)
    g1, bt1 = aux[:, 0:1], aux[:, 1:2]                   # clip_norm affine
    g2, bt2 = aux[:, 2:3], aux[:, 3:4]                   # attn_norm affine
    head_bias = aux[:, 4:4 + CHAN]                       # (C, C): 0 in-head, -1e30 off

    # ---- clip2flat (Linear) + clip_norm (GroupNorm, 1 channel per group) ----
    emb = emb_ref[0].astype(jnp.bfloat16)                # (C, C*E) block-diag emb
    clip_flat = jnp.dot(emb, wclip_ref[...],
                        preferred_element_type=jnp.float32) + bclip_ref[...]
    clip_out = _rows_norm(clip_flat) * g1 + bt1          # (C, HW)

    x = x_ref[0]                                         # (C, HW) f32

    # ---- stage [x ; clip_out] as one (2C, HW) = (8, 256) slab so every conv
    #      tap becomes ONE XLU roll + ONE aligned full-width store ------------
    src_scr[pl.ds(0, CHAN), :] = x
    src_scr[pl.ds(CHAN, CHAN), :] = clip_out
    src = src_scr[...]                                   # (2C, HW) f32

    # in-kernel border masks: flat index p, x coordinate = p & (SIZE-1)
    pcol = lax.broadcasted_iota(jnp.int32, (2 * CHAN, HW), 1)
    xmod = pcol & (SIZE - 1)

    for k in range(9):                                   # unrolled 3x3 taps
        oy, ox = k // 3 - 1, k % 3 - 1
        d = (oy * SIZE + ox) % HW
        # dst[p] = src[(p + d) % HW]  ==  roll right by (HW - d)
        rolled = src if d == 0 else pltpu.roll(src, HW - d, 1)
        conds = []
        if oy == -1:
            conds.append(pcol >= SIZE)                   # y-1 >= 0
        elif oy == 1:
            conds.append(pcol < HW - SIZE)               # y+1 <= SIZE-1
        if ox == -1:
            conds.append(xmod >= 1)                      # x-1 >= 0
        elif ox == 1:
            conds.append(xmod < SIZE - 1)                # x+1 <= SIZE-1
        if conds:
            ok = conds[0]
            for c in conds[1:]:
                ok = jnp.logical_and(ok, c)
            rolled = jnp.where(ok, rolled, 0.0)          # fold zero-padding mask
        # aligned (8, 256) f32 store at sublane offset k*8
        col_scr[pl.ds(k * 2 * CHAN, 2 * CHAN), :] = rolled

    # ---- attn_q + attn_kv 3x3 convs as ONE matmul (block-diagonal weight) ---
    qkv = jnp.dot(wqkv_ref[...], col_scr[...].astype(jnp.bfloat16),
                  preferred_element_type=jnp.float32)    # (3C, HW)
    q = qkv[:CHAN]
    kmat = qkv[CHAN:2 * CHAN]
    vmat = qkv[2 * CHAN:]

    # ---- scaled-dot-product attention, all heads via block-diagonal mask ----
    s = lax.dot_general(q.astype(jnp.bfloat16), kmat.astype(jnp.bfloat16),
                        (((1,), (1,)), ((), ())),
                        preferred_element_type=jnp.float32) * SCALE + head_bias
    m = jnp.max(s, axis=-1, keepdims=True)
    e = jnp.exp(s - m)
    # exact reciprocal: the denominator is only (C, 1), so exactness is free
    p = e * pl.reciprocal(jnp.sum(e, axis=-1, keepdims=True), approx=False)
    attn = jnp.dot(p.astype(jnp.bfloat16), vmat.astype(jnp.bfloat16),
                   preferred_element_type=jnp.float32)   # (C, HW)

    # ---- residual + attn_norm (GroupNorm) + clip_scale ----------------------
    y = x + attn
    out_ref[0] = (_rows_norm(y) * g2 + bt2) * cs_ref[b]


# ------------------------------ host wrapper ---------------------------------
def cross_attention(inputs, clip_embed, clip_scale, params):
    B, C, H, W = inputs.shape
    hw = H * W
    if clip_embed is None:
        clip_embed = jnp.zeros((B, CLIP_EMBLEN), jnp.float32)
    if clip_scale is None:
        clip_scale = jnp.zeros((B, 1, 1, 1), jnp.float32)

    x_flat = inputs.reshape(B, C, hw)
    cs_flat = clip_scale.reshape(B).astype(jnp.float32)
    # Block-diagonal embedding layout: emb_blk[b, c, c*E + e] = clip_embed[b, e]
    # (pure layout glue so the clip Linear is one MXU matmul with M=C).
    eye = jnp.eye(C, dtype=clip_embed.dtype)
    emb_blk = (clip_embed[:, None, None, :] * eye[None, :, :, None]).reshape(
        B, C, C * CLIP_EMBLEN)

    out = pl.pallas_call(
        _fused_kernel,
        out_shape=jax.ShapeDtypeStruct((B, C, hw), jnp.float32),
        grid=(B,),
        in_specs=[
            pl.BlockSpec(memory_space=pltpu.MemorySpace.SMEM),            # clip_scale
            pl.BlockSpec((1, C, C * CLIP_EMBLEN), lambda b: (b, 0, 0)),   # emb (block-diag)
            pl.BlockSpec((C * CLIP_EMBLEN, hw), lambda b: (0, 0)),        # clip weight (bf16)
            pl.BlockSpec((C, hw), lambda b: (0, 0)),                      # clip bias
            pl.BlockSpec((1, C, hw), lambda b: (b, 0, 0)),                # inputs (flat)
            pl.BlockSpec((3 * C, 18 * C), lambda b: (0, 0)),              # W_qkv block-diag (bf16)
            pl.BlockSpec((C, 4 + C), lambda b: (0, 0)),                   # affine + head bias
        ],
        out_specs=pl.BlockSpec((1, C, hw), lambda b: (b, 0, 0)),
        scratch_shapes=[pltpu.VMEM((2 * C, hw), jnp.float32),     # [x ; clip_out] staging
                        pltpu.VMEM((18 * C, hw), jnp.float32)],   # stacked im2col columns
        compiler_params=pltpu.CompilerParams(
            dimension_semantics=("parallel",)),   # batch axis -> both TCs on v7x
    )(cs_flat, emb_blk, params['w_clip_blk'], params['b_clip_r'], x_flat,
      params['w_qkv_mat'], params['aux'])
    return out.reshape(B, C, H, W)


# ------------------------- deterministic parameter init ---------------------
def init_params(key):
    ks = jax.random.split(key, 8)
    w_clip = jax.random.normal(ks[0], (CLIP_EMBLEN, CHAN * HW), jnp.float32) / math.sqrt(CLIP_EMBLEN)
    b_clip = 0.1 * jax.random.normal(ks[1], (CHAN * HW,), jnp.float32)
    g1 = 1.0 + 0.1 * jax.random.normal(ks[2], (CHAN,), jnp.float32)
    bt1 = 0.1 * jax.random.normal(ks[3], (CHAN,), jnp.float32)
    w_kv = jax.random.normal(ks[4], (2 * CHAN, CHAN, 3, 3), jnp.float32) / math.sqrt(CHAN * 9)
    w_q = jax.random.normal(ks[5], (CHAN, CHAN, 3, 3), jnp.float32) / math.sqrt(CHAN * 9)
    g2 = 1.0 + 0.1 * jax.random.normal(ks[6], (CHAN,), jnp.float32)
    bt2 = 0.1 * jax.random.normal(ks[7], (CHAN,), jnp.float32)

    hid = jnp.arange(CHAN) // HEADLEN
    head_bias = jnp.where(hid[:, None] == hid[None, :], 0.0, NEG_BIG).astype(jnp.float32)
    aux = jnp.concatenate([jnp.stack([g1, bt1, g2, bt2], axis=1), head_bias], axis=1)

    # Combined block-diagonal conv weight (3C, 18C): per tap k, columns
    # [k*2C, k*2C+C) multiply the x tap and feed the q rows; columns
    # [k*2C+C, (k+1)*2C) multiply the clip_out tap and feed the kv rows.
    blocks = []
    for k in range(9):
        ky, kx = k // 3, k % 3
        top = jnp.concatenate([w_q[:, :, ky, kx],
                               jnp.zeros((CHAN, CHAN), jnp.float32)], axis=1)
        bot = jnp.concatenate([jnp.zeros((2 * CHAN, CHAN), jnp.float32),
                               w_kv[:, :, ky, kx]], axis=1)
        blocks.append(jnp.concatenate([top, bot], axis=0))          # (3C, 2C)
    w_qkv_mat = jnp.concatenate(blocks, axis=1).astype(jnp.bfloat16)  # (3C, 18C)

    return dict(
        # raw parameters (used by the pure-JAX reference)
        w_clip=w_clip, b_clip=b_clip, g1=g1, bt1=bt1,
        w_kv=w_kv, w_q=w_q, g2=g2, bt2=bt2,
        # kernel-friendly re-packs (pure layout glue, no arithmetic)
        w_clip_blk=w_clip.reshape(CLIP_EMBLEN, CHAN, HW)
                         .transpose(1, 0, 2)
                         .reshape(CHAN * CLIP_EMBLEN, HW).astype(jnp.bfloat16),
        b_clip_r=b_clip.reshape(CHAN, HW),
        w_qkv_mat=w_qkv_mat,
        aux=aux,                 # (C, 4+C): [gamma1, beta1, gamma2, beta2 | head bias]
    )


# ------------------------------ pure-JAX reference ---------------------------
def _group_norm(x, gamma, beta):
    mean = x.mean(axis=(2, 3), keepdims=True)
    var = ((x - mean) ** 2).mean(axis=(2, 3), keepdims=True)
    xn = (x - mean) * lax.rsqrt(var + EPS)
    return xn * gamma[None, :, None, None] + beta[None, :, None, None]


def reference(inputs, clip_embed, clip_scale, p):
    B, C, H, W = inputs.shape
    clip_flat = clip_embed @ p['w_clip'] + p['b_clip']
    clip_out = _group_norm(clip_flat.reshape(B, C, SIZE, SIZE), p['g1'], p['bt1'])
    dn = ('NCHW', 'OIHW', 'NCHW')
    kv = lax.conv_general_dilated(clip_out, p['w_kv'], (1, 1), 'SAME', dimension_numbers=dn)
    key_, value = kv[:, :C], kv[:, C:]
    query = lax.conv_general_dilated(inputs, p['w_q'], (1, 1), 'SAME', dimension_numbers=dn)
    heads = lambda t: t.reshape(B, NHEADS, HEADLEN, H * W)
    q, k, v = heads(query), heads(key_), heads(value)
    s = jnp.einsum('bnld,bnmd->bnlm', q, k) * SCALE
    a = jax.nn.softmax(s, axis=-1)
    o = jnp.einsum('bnlm,bnmd->bnld', a, v)
    out = inputs + o.reshape(B, C, H, W)
    out = _group_norm(out, p['g2'], p['bt2'])
    return out * clip_scale


if __name__ == "__main__":
    key = jax.random.PRNGKey(0)
    kp, ki, ke, ks = jax.random.split(key, 4)
    params = init_params(kp)
    inputs = jax.random.normal(ki, (BATCH, CHAN, SIZE, SIZE), jnp.float32)
    clip_embed = jax.random.normal(ke, (BATCH, CLIP_EMBLEN), jnp.float32)
    clip_scale = 0.5 + jax.random.uniform(ks, (BATCH, 1, 1, 1), jnp.float32)

    out = cross_attention(inputs, clip_embed, clip_scale, params)
    out = jax.block_until_ready(out)

    ref = reference(inputs, clip_embed, clip_scale, params)
    err = float(jnp.max(jnp.abs(out - ref)))
    # bf16 matmul operands (f32 accumulation) vs an all-f32 reference.
    assert err < 3e-2, f"mismatch vs reference: max abs err {err}"
    print("KERNEL_OK")
</pallas_src>

<mosaic_0001>
module attributes {stable_mosaic.version = 11 : i64} {
  func.func @_fused_kernel(%arg0: i32, %arg1: memref<2xf32, #tpu.memory_space<smem>>, %arg2: memref<1x4x128xf32, #tpu.memory_space<vmem>>, %arg3: memref<128x256xbf16, #tpu.memory_space<vmem>>, %arg4: memref<4x256xf32, #tpu.memory_space<vmem>>, %arg5: memref<1x4x256xf32, #tpu.memory_space<vmem>>, %arg6: memref<12x72xbf16, #tpu.memory_space<vmem>>, %arg7: memref<4x8xf32, #tpu.memory_space<vmem>>, %arg8: memref<1x4x256xf32, #tpu.memory_space<vmem>>, %arg9: memref<8x256xf32, #tpu.memory_space<vmem>>, %arg10: memref<72x256xf32, #tpu.memory_space<vmem>>) attributes {dimension_semantics = [#tpu.dimension_semantics<parallel>], iteration_bounds = array<i64: 2>, scalar_prefetch = 0 : i64, scratch_operands = 2 : i64, tpu.core_type = #tpu.core_type<tc>, window_params = [{transform_indices = @transform_0, window_bounds = array<i64: 2>}, {transform_indices = @transform_1, window_bounds = array<i64: 1, 4, 128>}, {pipeline_mode = #tpu.pipeline_mode<synchronous>, transform_indices = @transform_2, window_bounds = array<i64: 128, 256>}, {pipeline_mode = #tpu.pipeline_mode<synchronous>, transform_indices = @transform_3, window_bounds = array<i64: 4, 256>}, {transform_indices = @transform_4, window_bounds = array<i64: 1, 4, 256>}, {pipeline_mode = #tpu.pipeline_mode<synchronous>, transform_indices = @transform_5, window_bounds = array<i64: 12, 72>}, {pipeline_mode = #tpu.pipeline_mode<synchronous>, transform_indices = @transform_6, window_bounds = array<i64: 4, 8>}, {transform_indices = @transform_7, window_bounds = array<i64: 1, 4, 256>}]} {
    %c0 = arith.constant 0 : index
    %c0_0 = arith.constant 0 : index
    %0 = vector.load %arg7[%c0, %c0_0] : memref<4x8xf32, #tpu.memory_space<vmem>>, vector<4x8xf32>
    %1 = vector.extract_strided_slice %0 {offsets = [0, 0], sizes = [4, 1], strides = [1, 1]} : vector<4x8xf32> to vector<4x1xf32>
    %2 = vector.extract_strided_slice %0 {offsets = [0, 1], sizes = [4, 1], strides = [1, 1]} : vector<4x8xf32> to vector<4x1xf32>
    %3 = vector.extract_strided_slice %0 {offsets = [0, 2], sizes = [4, 1], strides = [1, 1]} : vector<4x8xf32> to vector<4x1xf32>
    %4 = vector.extract_strided_slice %0 {offsets = [0, 3], sizes = [4, 1], strides = [1, 1]} : vector<4x8xf32> to vector<4x1xf32>
    %5 = vector.extract_strided_slice %0 {offsets = [0, 4], sizes = [4, 4], strides = [1, 1]} : vector<4x8xf32> to vector<4x4xf32>
    %c0_1 = arith.constant 0 : index
    %c0_2 = arith.constant 0 : index
    %c0_3 = arith.constant 0 : index
    %6 = vector.load %arg2[%c0_1, %c0_2, %c0_3] : memref<1x4x128xf32, #tpu.memory_space<vmem>>, vector<1x4x128xf32>
    %7 = vector.shape_cast %6 : vector<1x4x128xf32> to vector<4x128xf32>
    %8 = arith.truncf %7 : vector<4x128xf32> to vector<4x128xbf16>
    %c0_4 = arith.constant 0 : index
    %c0_5 = arith.constant 0 : index
    %9 = vector.load %arg3[%c0_4, %c0_5] : memref<128x256xbf16, #tpu.memory_space<vmem>>, vector<128x256xbf16>
    %cst = arith.constant dense<0.000000e+00> : vector<4x256xf32>
    %10 = tpu.matmul %8, %9, %cst {dimension_numbers = #tpu.dot_dimension_numbers<[1], [0], [0], [1], [0, 0, 1, 1], [], []>} : vector<4x128xbf16>, vector<128x256xbf16>, vector<4x256xf32> -> vector<4x256xf32>
    %c0_6 = arith.constant 0 : index
    %c0_7 = arith.constant 0 : index
    %11 = vector.load %arg4[%c0_6, %c0_7] : memref<4x256xf32, #tpu.memory_space<vmem>>, vector<4x256xf32>
    %12 = arith.addf %10, %11 : vector<4x256xf32>
    %cst_8 = arith.constant dense<0.000000e+00> : vector<4xf32>
    %13 = vector.multi_reduction <add>, %12, %cst_8 [1] : vector<4x256xf32> to vector<4xf32>
    %14 = vector.shape_cast %13 : vector<4xf32> to vector<4x1xf32>
    %cst_9 = arith.constant 3.906250e-03 : f32
    %15 = vector.broadcast %cst_9 : f32 to vector<4x1xf32>
    %16 = arith.mulf %14, %15 : vector<4x1xf32>
    %17 = arith.mulf %12, %12 : vector<4x256xf32>
    %cst_10 = arith.constant dense<0.000000e+00> : vector<4xf32>
    %18 = vector.multi_reduction <add>, %17, %cst_10 [1] : vector<4x256xf32> to vector<4xf32>
    %19 = vector.shape_cast %18 : vector<4xf32> to vector<4x1xf32>
    %cst_11 = arith.constant 3.906250e-03 : f32
    %20 = vector.broadcast %cst_11 : f32 to vector<4x1xf32>
    %21 = arith.mulf %19, %20 : vector<4x1xf32>
    %22 = arith.mulf %16, %16 : vector<4x1xf32>
    %23 = arith.subf %21, %22 : vector<4x1xf32>
    %24 = vector.broadcast %16 : vector<4x1xf32> to vector<4x256xf32>
    %25 = arith.subf %12, %24 : vector<4x256xf32>
    %cst_12 = arith.constant 9.99999974E-6 : f32
    %26 = vector.broadcast %cst_12 : f32 to vector<4x1xf32>
    %27 = arith.addf %23, %26 : vector<4x1xf32>
    %28 = math.rsqrt %27 : vector<4x1xf32>
    %29 = vector.broadcast %28 : vector<4x1xf32> to vector<4x256xf32>
    %30 = arith.mulf %25, %29 : vector<4x256xf32>
    %31 = vector.broadcast %1 : vector<4x1xf32> to vector<4x256xf32>
    %32 = arith.mulf %30, %31 : vector<4x256xf32>
    %33 = vector.broadcast %2 : vector<4x1xf32> to vector<4x256xf32>
    %34 = arith.addf %32, %33 : vector<4x256xf32>
    %c0_13 = arith.constant 0 : index
    %c0_14 = arith.constant 0 : index
    %c0_15 = arith.constant 0 : index
    %35 = vector.load %arg5[%c0_13, %c0_14, %c0_15] : memref<1x4x256xf32, #tpu.memory_space<vmem>>, vector<1x4x256xf32>
    %36 = vector.shape_cast %35 : vector<1x4x256xf32> to vector<4x256xf32>
    %c0_16 = arith.constant 0 : index
    %c0_17 = arith.constant 0 : index
    %37 = vector.load %arg9[%c0_16, %c0_17] : memref<8x256xf32, #tpu.memory_space<vmem>>, vector<4x256xf32>
    tpu.vector_store %arg9[%c0_16, %c0_17], %36 {strides = array<i32>} : memref<8x256xf32, #tpu.memory_space<vmem>>, vector<4x256xf32>,
    %c4 = arith.constant 4 : index
    %c0_18 = arith.constant 0 : index
    %38 = vector.load %arg9[%c4, %c0_18] : memref<8x256xf32, #tpu.memory_space<vmem>>, vector<4x256xf32>
    tpu.vector_store %arg9[%c4, %c0_18], %34 {strides = array<i32>} : memref<8x256xf32, #tpu.memory_space<vmem>>, vector<4x256xf32>,
    %c0_19 = arith.constant 0 : index
    %c0_20 = arith.constant 0 : index
    %39 = vector.load %arg9[%c0_19, %c0_20] : memref<8x256xf32, #tpu.memory_space<vmem>>, vector<8x256xf32>
    %40 = tpu.iota {dimensions = array<i32: 1>} : vector<8x256xi32>
    %c15_i32 = arith.constant 15 : i32
    %41 = vector.broadcast %c15_i32 : i32 to vector<8x256xi32>
    %42 = arith.andi %40, %41 : vector<8x256xi32>
    %c17_i32 = arith.constant 17 : i32
    %43 = tpu.dynamic_rotate %39 by %c17_i32 dim 1 : vector<8x256xf32>, i32 -> vector<8x256xf32>
    %c16_i32 = arith.constant 16 : i32
    %44 = vector.broadcast %c16_i32 : i32 to vector<8x256xi32>
    %45 = arith.cmpi sge, %40, %44 : vector<8x256xi32>
    %c1_i32 = arith.constant 1 : i32
    %46 = vector.broadcast %c1_i32 : i32 to vector<8x256xi32>
    %47 = arith.cmpi sge, %42, %46 : vector<8x256xi32>
    %48 = arith.andi %45, %47 : vector<8x256xi1>
    %cst_21 = arith.constant 0.000000e+00 : f32
    %49 = vector.broadcast %cst_21 : f32 to vector<8x256xf32>
    %50 = arith.select %48, %43, %49 : vector<8x256xi1>, vector<8x256xf32>
    %c0_22 = arith.constant 0 : index
    %c0_23 = arith.constant 0 : index
    %51 = vector.load %arg10[%c0_22, %c0_23] : memref<72x256xf32, #tpu.memory_space<vmem>>, vector<8x256xf32>
    tpu.vector_store %arg10[%c0_22, %c0_23], %50 {strides = array<i32>} : memref<72x256xf32, #tpu.memory_space<vmem>>, vector<8x256xf32>,
    %c16_i32_24 = arith.constant 16 : i32
    %52 = tpu.dynamic_rotate %39 by %c16_i32_24 dim 1 : vector<8x256xf32>, i32 -> vector<8x256xf32>
    %c16_i32_25 = arith.constant 16 : i32
    %53 = vector.broadcast %c16_i32_25 : i32 to vector<8x256xi32>
    %54 = arith.cmpi sge, %40, %53 : vector<8x256xi32>
    %cst_26 = arith.constant 0.000000e+00 : f32
    %55 = vector.broadcast %cst_26 : f32 to vector<8x256xf32>
    %56 = arith.select %54, %52, %55 : vector<8x256xi1>, vector<8x256xf32>
    %c8 = arith.constant 8 : index
    %c0_27 = arith.constant 0 : index
    %57 = vector.load %arg10[%c8, %c0_27] : memref<72x256xf32, #tpu.memory_space<vmem>>, vector<8x256xf32>
    tpu.vector_store %arg10[%c8, %c0_27], %56 {strides = array<i32>} : memref<72x256xf32, #tpu.memory_space<vmem>>, vector<8x256xf32>,
    %c15_i32_28 = arith.constant 15 : i32
    %58 = tpu.dynamic_rotate %39 by %c15_i32_28 dim 1 : vector<8x256xf32>, i32 -> vector<8x256xf32>
    %c16_i32_29 = arith.constant 16 : i32
    %59 = vector.broadcast %c16_i32_29 : i32 to vector<8x256xi32>
    %60 = arith.cmpi sge, %40, %59 : vector<8x256xi32>
    %c15_i32_30 = arith.constant 15 : i32
    %61 = vector.broadcast %c15_i32_30 : i32 to vector<8x256xi32>
    %62 = arith.cmpi slt, %42, %61 : vector<8x256xi32>
    %63 = arith.andi %60, %62 : vector<8x256xi1>
    %cst_31 = arith.constant 0.000000e+00 : f32
    %64 = vector.broadcast %cst_31 : f32 to vector<8x256xf32>
    %65 = arith.select %63, %58, %64 : vector<8x256xi1>, vector<8x256xf32>
    %c16 = arith.constant 16 : index
    %c0_32 = arith.constant 0 : index
    %66 = vector.load %arg10[%c16, %c0_32] : memref<72x256xf32, #tpu.memory_space<vmem>>, vector<8x256xf32>
    tpu.vector_store %arg10[%c16, %c0_32], %65 {strides = array<i32>} : memref<72x256xf32, #tpu.memory_space<vmem>>, vector<8x256xf32>,
    %c1_i32_33 = arith.constant 1 : i32
    %67 = tpu.dynamic_rotate %39 by %c1_i32_33 dim 1 : vector<8x256xf32>, i32 -> vector<8x256xf32>
    %c1_i32_34 = arith.constant 1 : i32
    %68 = vector.broadcast %c1_i32_34 : i32 to vector<8x256xi32>
    %69 = arith.cmpi sge, %42, %68 : vector<8x256xi32>
    %cst_35 = arith.constant 0.000000e+00 : f32
    %70 = vector.broadcast %cst_35 : f32 to vector<8x256xf32>
    %71 = arith.select %69, %67, %70 : vector<8x256xi1>, vector<8x256xf32>
    %c24 = arith.constant 24 : index
    %c0_36 = arith.constant 0 : index
    %72 = vector.load %arg10[%c24, %c0_36] : memref<72x256xf32, #tpu.memory_space<vmem>>, vector<8x256xf32>
    tpu.vector_store %arg10[%c24, %c0_36], %71 {strides = array<i32>} : memref<72x256xf32, #tpu.memory_space<vmem>>, vector<8x256xf32>,
    %c32 = arith.constant 32 : index
    %c0_37 = arith.constant 0 : index
    %73 = vector.load %arg10[%c32, %c0_37] : memref<72x256xf32, #tpu.memory_space<vmem>>, vector<8x256xf32>
    tpu.vector_store %arg10[%c32, %c0_37], %39 {strides = array<i32>} : memref<72x256xf32, #tpu.memory_space<vmem>>, vector<8x256xf32>,
    %c255_i32 = arith.constant 255 : i32
    %74 = tpu.dynamic_rotate %39 by %c255_i32 dim 1 : vector<8x256xf32>, i32 -> vector<8x256xf32>
    %c15_i32_38 = arith.constant 15 : i32
    %75 = vector.broadcast %c15_i32_38 : i32 to vector<8x256xi32>
    %76 = arith.cmpi slt, %42, %75 : vector<8x256xi32>
    %cst_39 = arith.constant 0.000000e+00 : f32
    %77 = vector.broadcast %cst_39 : f32 to vector<8x256xf32>
    %78 = arith.select %76, %74, %77 : vector<8x256xi1>, vector<8x256xf32>
    %c40 = arith.constant 40 : index
    %c0_40 = arith.constant 0 : index
    %79 = vector.load %arg10[%c40, %c0_40] : memref<72x256xf32, #tpu.memory_space<vmem>>, vector<8x256xf32>
    tpu.vector_store %arg10[%c40, %c0_40], %78 {strides = array<i32>} : memref<72x256xf32, #tpu.memory_space<vmem>>, vector<8x256xf32>,
    %c241_i32 = arith.constant 241 : i32
    %80 = tpu.dynamic_rotate %39 by %c241_i32 dim 1 : vector<8x256xf32>, i32 -> vector<8x256xf32>
    %c240_i32 = arith.constant 240 : i32
    %81 = vector.broadcast %c240_i32 : i32 to vector<8x256xi32>
    %82 = arith.cmpi slt, %40, %81 : vector<8x256xi32>
    %c1_i32_41 = arith.constant 1 : i32
    %83 = vector.broadcast %c1_i32_41 : i32 to vector<8x256xi32>
    %84 = arith.cmpi sge, %42, %83 : vector<8x256xi32>
    %85 = arith.andi %82, %84 : vector<8x256xi1>
    %cst_42 = arith.constant 0.000000e+00 : f32
    %86 = vector.broadcast %cst_42 : f32 to vector<8x256xf32>
    %87 = arith.select %85, %80, %86 : vector<8x256xi1>, vector<8x256xf32>
    %c48 = arith.constant 48 : index
    %c0_43 = arith.constant 0 : index
    %88 = vector.load %arg10[%c48, %c0_43] : memref<72x256xf32, #tpu.memory_space<vmem>>, vector<8x256xf32>
    tpu.vector_store %arg10[%c48, %c0_43], %87 {strides = array<i32>} : memref<72x256xf32, #tpu.memory_space<vmem>>, vector<8x256xf32>,
    %c240_i32_44 = arith.constant 240 : i32
    %89 = tpu.dynamic_rotate %39 by %c240_i32_44 dim 1 : vector<8x256xf32>, i32 -> vector<8x256xf32>
    %c240_i32_45 = arith.constant 240 : i32
    %90 = vector.broadcast %c240_i32_45 : i32 to vector<8x256xi32>
    %91 = arith.cmpi slt, %40, %90 : vector<8x256xi32>
    %cst_46 = arith.constant 0.000000e+00 : f32
    %92 = vector.broadcast %cst_46 : f32 to vector<8x256xf32>
    %93 = arith.select %91, %89, %92 : vector<8x256xi1>, vector<8x256xf32>
    %c56 = arith.constant 56 : index
    %c0_47 = arith.constant 0 : index
    %94 = vector.load %arg10[%c56, %c0_47] : memref<72x256xf32, #tpu.memory_space<vmem>>, vector<8x256xf32>
    tpu.vector_store %arg10[%c56, %c0_47], %93 {strides = array<i32>} : memref<72x256xf32, #tpu.memory_space<vmem>>, vector<8x256xf32>,
    %c239_i32 = arith.constant 239 : i32
    %95 = tpu.dynamic_rotate %39 by %c239_i32 dim 1 : vector<8x256xf32>, i32 -> vector<8x256xf32>
    %c240_i32_48 = arith.constant 240 : i32
    %96 = vector.broadcast %c240_i32_48 : i32 to vector<8x256xi32>
    %97 = arith.cmpi slt, %40, %96 : vector<8x256xi32>
    %c15_i32_49 = arith.constant 15 : i32
    %98 = vector.broadcast %c15_i32_49 : i32 to vector<8x256xi32>
    %99 = arith.cmpi slt, %42, %98 : vector<8x256xi32>
    %100 = arith.andi %97, %99 : vector<8x256xi1>
    %cst_50 = arith.constant 0.000000e+00 : f32
    %101 = vector.broadcast %cst_50 : f32 to vector<8x256xf32>
    %102 = arith.select %100, %95, %101 : vector<8x256xi1>, vector<8x256xf32>
    %c64 = arith.constant 64 : index
    %c0_51 = arith.constant 0 : index
    %103 = vector.load %arg10[%c64, %c0_51] : memref<72x256xf32, #tpu.memory_space<vmem>>, vector<8x256xf32>
    tpu.vector_store %arg10[%c64, %c0_51], %102 {strides = array<i32>} : memref<72x256xf32, #tpu.memory_space<vmem>>, vector<8x256xf32>,
    %c0_52 = arith.constant 0 : index
    %c0_53 = arith.constant 0 : index
    %104 = vector.load %arg6[%c0_52, %c0_53] : memref<12x72xbf16, #tpu.memory_space<vmem>>, vector<12x72xbf16>
    %c0_54 = arith.constant 0 : index
    %c0_55 = arith.constant 0 : index
    %105 = vector.load %arg10[%c0_54, %c0_55] : memref<72x256xf32, #tpu.memory_space<vmem>>, vector<72x256xf32>
    %106 = arith.truncf %105 : vector<72x256xf32> to vector<72x256xbf16>
    %cst_56 = arith.constant dense<0.000000e+00> : vector<12x256xf32>
    %107 = tpu.matmul %104, %106, %cst_56 {dimension_numbers = #tpu.dot_dimension_numbers<[1], [0], [0], [1], [0, 0, 1, 1], [], []>} : vector<12x72xbf16>, vector<72x256xbf16>, vector<12x256xf32> -> vector<12x256xf32>
    %108 = vector.extract_strided_slice %107 {offsets = [0, 0], sizes = [4, 256], strides = [1, 1]} : vector<12x256xf32> to vector<4x256xf32>
    %109 = vector.extract_strided_slice %107 {offsets = [4, 0], sizes = [4, 256], strides = [1, 1]} : vector<12x256xf32> to vector<4x256xf32>
    %110 = vector.extract_strided_slice %107 {offsets = [8, 0], sizes = [4, 256], strides = [1, 1]} : vector<12x256xf32> to vector<4x256xf32>
    %111 = arith.truncf %108 : vector<4x256xf32> to vector<4x256xbf16>
    %112 = arith.truncf %109 : vector<4x256xf32> to vector<4x256xbf16>
    %cst_57 = arith.constant dense<0.000000e+00> : vector<4x4xf32>
    %113 = tpu.matmul %111, %112, %cst_57 {dimension_numbers = #tpu.dot_dimension_numbers<[1], [1], [0], [0], [0, 0, 1, 0], [], []>} : vector<4x256xbf16>, vector<4x256xbf16>, vector<4x4xf32> -> vector<4x4xf32>
    %cst_58 = arith.constant 6.250000e-02 : f32
    %114 = vector.broadcast %cst_58 : f32 to vector<4x4xf32>
    %115 = arith.mulf %113, %114 : vector<4x4xf32>
    %116 = arith.addf %115, %5 : vector<4x4xf32>
    %cst_59 = arith.constant dense<0xFF800000> : vector<4xf32>
    %117 = vector.multi_reduction <maximumf>, %116, %cst_59 [1] : vector<4x4xf32> to vector<4xf32>
    %118 = vector.shape_cast %117 : vector<4xf32> to vector<4x1xf32>
    %119 = vector.broadcast %118 : vector<4x1xf32> to vector<4x4xf32>
    %120 = arith.subf %116, %119 : vector<4x4xf32>
    %121 = math.exp %120 : vector<4x4xf32>
    %cst_60 = arith.constant dense<0.000000e+00> : vector<4xf32>
    %122 = vector.multi_reduction <add>, %121, %cst_60 [1] : vector<4x4xf32> to vector<4xf32>
    %123 = vector.shape_cast %122 : vector<4xf32> to vector<4x1xf32>
    %124 = tpu.reciprocal %123 : vector<4x1xf32> -> vector<4x1xf32>
    %125 = vector.broadcast %124 : vector<4x1xf32> to vector<4x4xf32>
    %126 = arith.mulf %121, %125 : vector<4x4xf32>
    %127 = arith.truncf %126 : vector<4x4xf32> to vector<4x4xbf16>
    %128 = arith.truncf %110 : vector<4x256xf32> to vector<4x256xbf16>
    %cst_61 = arith.constant dense<0.000000e+00> : vector<4x256xf32>
    %129 = tpu.matmul %127, %128, %cst_61 {dimension_numbers = #tpu.dot_dimension_numbers<[1], [0], [0], [1], [0, 0, 1, 1], [], []>} : vector<4x4xbf16>, vector<4x256xbf16>, vector<4x256xf32> -> vector<4x256xf32>
    %130 = arith.addf %36, %129 : vector<4x256xf32>
    %cst_62 = arith.constant dense<0.000000e+00> : vector<4xf32>
    %131 = vector.multi_reduction <add>, %130, %cst_62 [1] : vector<4x256xf32> to vector<4xf32>
    %132 = vector.shape_cast %131 : vector<4xf32> to vector<4x1xf32>
    %cst_63 = arith.constant 3.906250e-03 : f32
    %133 = vector.broadcast %cst_63 : f32 to vector<4x1xf32>
    %134 = arith.mulf %132, %133 : vector<4x1xf32>
    %135 = arith.mulf %130, %130 : vector<4x256xf32>
    %cst_64 = arith.constant dense<0.000000e+00> : vector<4xf32>
    %136 = vector.multi_reduction <add>, %135, %cst_64 [1] : vector<4x256xf32> to vector<4xf32>
    %137 = vector.shape_cast %136 : vector<4xf32> to vector<4x1xf32>
    %cst_65 = arith.constant 3.906250e-03 : f32
    %138 = vector.broadcast %cst_65 : f32 to vector<4x1xf32>
    %139 = arith.mulf %137, %138 : vector<4x1xf32>
    %140 = arith.mulf %134, %134 : vector<4x1xf32>
    %141 = arith.subf %139, %140 : vector<4x1xf32>
    %142 = vector.broadcast %134 : vector<4x1xf32> to vector<4x256xf32>
    %143 = arith.subf %130, %142 : vector<4x256xf32>
    %cst_66 = arith.constant 9.99999974E-6 : f32
    %144 = vector.broadcast %cst_66 : f32 to vector<4x1xf32>
    %145 = arith.addf %141, %144 : vector<4x1xf32>
    %146 = math.rsqrt %145 : vector<4x1xf32>
    %147 = vector.broadcast %146 : vector<4x1xf32> to vector<4x256xf32>
    %148 = arith.mulf %143, %147 : vector<4x256xf32>
    %149 = vector.broadcast %3 : vector<4x1xf32> to vector<4x256xf32>
    %150 = arith.mulf %148, %149 : vector<4x256xf32>
    %151 = vector.broadcast %4 : vector<4x1xf32> to vector<4x256xf32>
    %152 = arith.addf %150, %151 : vector<4x256xf32>
    %153 = arith.index_cast %arg0 : i32 to index
    %154 = memref.load %arg1[%153] : memref<2xf32, #tpu.memory_space<smem>>
    %155 = vector.broadcast %154 : f32 to vector<4x256xf32>
    %156 = arith.mulf %152, %155 : vector<4x256xf32>
    %c0_67 = arith.constant 0 : index
    %c0_68 = arith.constant 0 : index
    %c0_69 = arith.constant 0 : index
    %157 = vector.load %arg8[%c0_67, %c0_68, %c0_69] : memref<1x4x256xf32, #tpu.memory_space<vmem>>, vector<1x4x256xf32>
    %158 = vector.shape_cast %157 : vector<1x4x256xf32> to vector<4x256xf32>
    %159 = vector.shape_cast %156 : vector<4x256xf32> to vector<1x4x256xf32>
    tpu.vector_store %arg8[%c0_67, %c0_68, %c0_69], %159 {strides = array<i32>} : memref<1x4x256xf32, #tpu.memory_space<vmem>>, vector<1x4x256xf32>,
    return
  }
  func.func @transform_0(%arg0: i32) -> i32 {
    %c0_i32 = arith.constant 0 : i32
    %c0_i32_0 = arith.constant 0 : i32
    return %c0_i32 : i32
  }
  func.func @transform_1(%arg0: i32) -> (i32, i32, i32) {
    %c0_i32 = arith.constant 0 : i32
    %c0_i32_0 = arith.constant 0 : i32
    %c0_i32_1 = arith.constant 0 : i32
    return %arg0, %c0_i32, %c0_i32_0 : i32, i32, i32
  }
  func.func @transform_2(%arg0: i32) -> (i32, i32) {
    %c0_i32 = arith.constant 0 : i32
    %c0_i32_0 = arith.constant 0 : i32
    %c0_i32_1 = arith.constant 0 : i32
    return %c0_i32, %c0_i32_0 : i32, i32
  }
  func.func @transform_3(%arg0: i32) -> (i32, i32) {
    %c0_i32 = arith.constant 0 : i32
    %c0_i32_0 = arith.constant 0 : i32
    %c0_i32_1 = arith.constant 0 : i32
    return %c0_i32, %c0_i32_0 : i32, i32
  }
  func.func @transform_4(%arg0: i32) -> (i32, i32, i32) {
    %c0_i32 = arith.constant 0 : i32
    %c0_i32_0 = arith.constant 0 : i32
    %c0_i32_1 = arith.constant 0 : i32
    return %arg0, %c0_i32, %c0_i32_0 : i32, i32, i32
  }
  func.func @transform_5(%arg0: i32) -> (i32, i32) {
    %c0_i32 = arith.constant 0 : i32
    %c0_i32_0 = arith.constant 0 : i32
    %c0_i32_1 = arith.constant 0 : i32
    return %c0_i32, %c0_i32_0 : i32, i32
  }
  func.func @transform_6(%arg0: i32) -> (i32, i32) {
    %c0_i32 = arith.constant 0 : i32
    %c0_i32_0 = arith.constant 0 : i32
    %c0_i32_1 = arith.constant 0 : i32
    return %c0_i32, %c0_i32_0 : i32, i32
  }
  func.func @transform_7(%arg0: i32) -> (i32, i32, i32) {
    %c0_i32 = arith.constant 0 : i32
    %c0_i32_0 = arith.constant 0 : i32
    %c0_i32_1 = arith.constant 0 : i32
    return %arg0, %c0_i32, %c0_i32_0 : i32, i32, i32
  }
}

</mosaic_0001>

<llo_original>
// kernel: tpu_custom_call.1
$region0: #{tpu_custom_call.1}
  #allocation0 [shape = 'u32[]', space=smem, size = 0x4, offset = 0x4, fixed_abs, tag = 'smem constant byte address 0x4 - core index']
  #allocation1 [shape = 'u32[72,128]{1,0:T(1,128)}', space=vmem, size = 0x9000, scoped, tag = 'internal scratch']
  #allocation2 [shape = 'f32[8,256]{1,0:T(8,128)}', space=vmem, size = 0x2000, scoped, tag = 'scratch operand']
  #allocation3 [shape = 'f32[72,256]{1,0:T(8,128)}', space=vmem, size = 0x12000, scoped, tag = 'scratch operand']
  %s0 = inlined_call_operand.hbm [shape: f32[2], index: 0, kind: input, shape index: {}]
  %s1 = inlined_call_operand.hbm [shape: f32[2,4,128], index: 1, kind: input, shape index: {}]
  %s2 = inlined_call_operand.hbm [shape: bf16[128,256], index: 2, kind: input, shape index: {}]
  %s3 = inlined_call_operand.hbm [shape: f32[4,256], index: 3, kind: input, shape index: {}]
  %s4 = inlined_call_operand.hbm [shape: f32[2,4,256], index: 4, kind: input, shape index: {}]
  %s5 = inlined_call_operand.hbm [shape: bf16[12,72], index: 5, kind: input, shape index: {}]
  %s6 = inlined_call_operand.vmem [shape: f32[4,8], index: 6, kind: input, shape index: {}]
  %s7 = inlined_call_operand.hbm [shape: f32[2,4,256], index: 7, kind: output, shape index: {}]
  %s8 = sld [smem:[#allocation0]]
  $region85: #{tpu_custom_call.1} parent=0
    _
  %s10 = ssub.s32 1, %s8
  %s11 = scalar_select 0, %s10, %s8
  $region1: #{tpu_custom_call.1} parent=0
    #allocation4 [shape = 'u8[512]{0}', space=smem, size = 0x200, scoped, tag = 'input window, operand 0, single buffered']
    #allocation5 [shape = 's32[2]{0}', space=sflag, size = 0x8, scoped, tag = 'scoped memory for tpu_custom_call.1']
    #allocation6 [shape = 's32[2]{0}', space=sflag, size = 0x8, scoped, tag = 'scoped memory for tpu_custom_call.1']
    #allocation7 [shape = 's32[2]{0}', space=sflag, size = 0x8, scoped, tag = 'scoped memory for tpu_custom_call.1']
    #allocation8 [shape = 'u8[4096]{0}', space=vmem, size = 0x1000, scoped, tag = 'input window, operand 1']
    #allocation9 [shape = 'u8[65536]{0}', space=vmem, size = 0x10000, scoped, tag = 'input window, operand 2, single buffered']
    #allocation10 [shape = 's32[1]{0}', space=sflag, size = 0x4, scoped, tag = 'scoped memory for tpu_custom_call.1']
    #allocation11 [shape = 'u8[4096]{0}', space=vmem, size = 0x1000, scoped, tag = 'input window, operand 3, single buffered']
    #allocation12 [shape = 'u8[8192]{0}', space=vmem, size = 0x2000, scoped, tag = 'input window, operand 4']
    #allocation13 [shape = 's32[2]{0}', space=sflag, size = 0x8, scoped, tag = 'scoped memory for tpu_custom_call.1']
    #allocation14 [shape = 'u8[4096]{0}', space=vmem, size = 0x1000, scoped, tag = 'input window, operand 5, single buffered']
    #allocation15 [shape = 'u8[8192]{0}', space=vmem, size = 0x2000, scoped, tag = 'output window, operand 0']
    %12 = vsyncpa [#allocation7], 0
    %13 = vsyncpa [#allocation5], 0
    %s14 = scalar_lea.sflag [#allocation5], 1
    %15 = vsyncpa %s14, 0
    %16 = vsyncpa [#allocation10], 0
    %17 = vsyncpa [#allocation13], 0
    %s18 = scalar_lea.sflag [#allocation13], 1
    %19 = vsyncpa %s18, 0
    %20 = vsyncpa [#allocation6], 0
    %s21 = scalar_lea.sflag [#allocation6], 1
    %22 = vsyncpa %s21, 0
    loop: start=0, step=1, limit=4
    $region2: #{tpu_custom_call.1} parent=1 // loop_pre_header
      _
    $region3: #{tpu_custom_call.1} parent=1 // loop_header
      %s24 = sphi 0, %s28
      %p25 = scmp.ge.s32.totalorder %s24, 4
      %s32 = sphi 0, %s32
      %s34 = sphi 0, %s32
      %s35 = sphi 0, %s34
      %s49 = sphi 0, %s35
      %s55 = sphi 0, %s57
      %s58 = sphi 0, %s55
      %s59 = sphi 0, %s58
      %s75 = sphi 0, %s59
      %s79 = sphi 0, %s79
      %s81 = sphi 0, %s79
      %s82 = sphi 0, %s81
      %s96 = sphi 0, %s82
      %s100 = sphi 0, %s100
      %s102 = sphi 0, %s100
      %s103 = sphi 0, %s102
      %s117 = sphi 0, %s103
      %s123 = sphi 0, %s125
      %s126 = sphi 0, %s123
      %s127 = sphi 0, %s126
      %s143 = sphi 0, %s127
      %s147 = sphi 0, %s147
      %s149 = sphi 0, %s147
      %s150 = sphi 0, %s149
      %s164 = sphi 0, %s150
      %s168 = sphi 0, %s168
      %s170 = sphi 0, %s168
      %s171 = sphi 0, %s170
      %s185 = sphi 0, %s171
      %s191 = sphi 0, %s193
      %s194 = sphi 0, %s191
      %s195 = sphi 0, %s194
      %s211 = sphi 0, %s195
    $region4: #{tpu_custom_call.1} parent=1 // loop_header_branch
      %27 = sbr.rel (%p25) target = $region8
    $region5: #{tpu_custom_call.1} parent=1 // loop_body
      %s29 = ssub.s32 %s24, 1
      %s30 = ssub.s32 %s24, 2
      %s31 = sadd.s32 %s24, 1
      %s33 = sadd.s32 %s32, 1
      %p36 = scmp.eq.s32.totalorder %s24, 1
      %p37 = scmp.ne.s32.totalorder %s32, %s34
      %p38 = scmp.eq.s32.totalorder %s24, 0
      %p39 = por %p37, %p38
      %p40 = scmp.ne.s32.totalorder %s32, %s34
      %p41 = scmp.eq.s32.totalorder %s29, 1
      %p42 = por %p40, %p41
      %p43 = scmp.ne.s32.totalorder %s34, %s35
      %p44 = scmp.eq.s32.totalorder %s29, 0
      %p45 = por %p43, %p44
      %p46 = scmp.ne.s32.totalorder %s34, %s35
      %p47 = scmp.eq.s32.totalorder %s30, 1
      %p48 = por %p46, %p47
      %p50 = scmp.ne.s32.totalorder %s35, %s49
      %p51 = scmp.eq.s32.totalorder %s30, 0
      %p52 = por %p50, %p51
      %s53 = ssub.s32 %s24, %s31
      %p54 = scmp.eq.s32.totalorder %s53, 0
      %s56 = sadd.s32 %s55, 1
      %s57 = scalar_select %p54, %s55, %s56
      %p60 = pneg %p54
      %p61 = scmp.eq.s32.totalorder %s24, 1
      %p62 = por %p60, %p61
      %p63 = scmp.ne.s32.totalorder %s55, %s58
      %p64 = scmp.eq.s32.totalorder %s24, 0
      %p65 = por %p63, %p64
      %p66 = scmp.ne.s32.totalorder %s55, %s58
      %p67 = scmp.eq.s32.totalorder %s29, 1
      %p68 = por %p66, %p67
      %p69 = scmp.ne.s32.totalorder %s58, %s59
      %p70 = scmp.eq.s32.totalorder %s29, 0
      %p71 = por %p69, %p70
      %p72 = scmp.ne.s32.totalorder %s58, %s59
      %p73 = scmp.eq.s32.totalorder %s30, 1
      %p74 = por %p72, %p73
      %p76 = scmp.ne.s32.totalorder %s59, %s75
      %p77 = scmp.eq.s32.totalorder %s30, 0
      %p78 = por %p76, %p77
      %s80 = sadd.s32 %s79, 1
      %p83 = scmp.eq.s32.totalorder %s24, 1
      %p84 = scmp.ne.s32.totalorder %s79, %s81
      %p85 = scmp.eq.s32.totalorder %s24, 0
      %p86 = por %p84, %p85
      %p87 = scmp.ne.s32.totalorder %s79, %s81
      %p88 = scmp.eq.s32.totalorder %s29, 1
      %p89 = por %p87, %p88
      %p90 = scmp.ne.s32.totalorder %s81, %s82
      %p91 = scmp.eq.s32.totalorder %s29, 0
      %p92 = por %p90, %p91
      %p93 = scmp.ne.s32.totalorder %s81, %s82
      %p94 = scmp.eq.s32.totalorder %s30, 1
      %p95 = por %p93, %p94
      %p97 = scmp.ne.s32.totalorder %s82, %s96
      %p98 = scmp.eq.s32.totalorder %s30, 0
      %p99 = por %p97, %p98
      %s101 = sadd.s32 %s100, 1
      %p104 = scmp.eq.s32.totalorder %s24, 1
      %p105 = scmp.ne.s32.totalorder %s100, %s102
      %p106 = scmp.eq.s32.totalorder %s24, 0
      %p107 = por %p105, %p106
      %p108 = scmp.ne.s32.totalorder %s100, %s102
      %p109 = scmp.eq.s32.totalorder %s29, 1
      %p110 = por %p108, %p109
      %p111 = scmp.ne.s32.totalorder %s102, %s103
      %p112 = scmp.eq.s32.totalorder %s29, 0
      %p113 = por %p111, %p112
      %p114 = scmp.ne.s32.totalorder %s102, %s103
      %p115 = scmp.eq.s32.totalorder %s30, 1
      %p116 = por %p114, %p115
      %p118 = scmp.ne.s32.totalorder %s103, %s117
      %p119 = scmp.eq.s32.totalorder %s30, 0
      %p120 = por %p118, %p119
      %s121 = ssub.s32 %s24, %s31
      %p122 = scmp.eq.s32.totalorder %s121, 0
      %s124 = sadd.s32 %s123, 1
      %s125 = scalar_select %p122, %s123, %s124
      %p128 = pneg %p122
      %p129 = scmp.eq.s32.totalorder %s24, 1
      %p130 = por %p128, %p129
      %p131 = scmp.ne.s32.totalorder %s123, %s126
      %p132 = scmp.eq.s32.totalorder %s24, 0
      %p133 = por %p131, %p132
      %p134 = scmp.ne.s32.totalorder %s123, %s126
      %p135 = scmp.eq.s32.totalorder %s29, 1
      %p136 = por %p134, %p135
      %p137 = scmp.ne.s32.totalorder %s126, %s127
      %p138 = scmp.eq.s32.totalorder %s29, 0
      %p139 = por %p137, %p138
      %p140 = scmp.ne.s32.totalorder %s126, %s127
      %p141 = scmp.eq.s32.totalorder %s30, 1
      %p142 = por %p140, %p141
      %p144 = scmp.ne.s32.totalorder %s127, %s143
      %p145 = scmp.eq.s32.totalorder %s30, 0
      %p146 = por %p144, %p145
      %s148 = sadd.s32 %s147, 1
      %p151 = scmp.eq.s32.totalorder %s24, 1
      %p152 = scmp.ne.s32.totalorder %s147, %s149
      %p153 = scmp.eq.s32.totalorder %s24, 0
      %p154 = por %p152, %p153
      %p155 = scmp.ne.s32.totalorder %s147, %s149
      %p156 = scmp.eq.s32.totalorder %s29, 1
      %p157 = por %p155, %p156
      %p158 = scmp.ne.s32.totalorder %s149, %s150
      %p159 = scmp.eq.s32.totalorder %s29, 0
      %p160 = por %p158, %p159
      %p161 = scmp.ne.s32.totalorder %s149, %s150
      %p162 = scmp.eq.s32.totalorder %s30, 1
      %p163 = por %p161, %p162
      %p165 = scmp.ne.s32.totalorder %s150, %s164
      %p166 = scmp.eq.s32.totalorder %s30, 0
      %p167 = por %p165, %p166
      %s169 = sadd.s32 %s168, 1
      %p172 = scmp.eq.s32.totalorder %s24, 1
      %p173 = scmp.ne.s32.totalorder %s168, %s170
      %p174 = scmp.eq.s32.totalorder %s24, 0
      %p175 = por %p173, %p174
      %p176 = scmp.ne.s32.totalorder %s168, %s170
      %p177 = scmp.eq.s32.totalorder %s29, 1
      %p178 = por %p176, %p177
      %p179 = scmp.ne.s32.totalorder %s170, %s171
      %p180 = scmp.eq.s32.totalorder %s29, 0
      %p181 = por %p179, %p180
      %p182 = scmp.ne.s32.totalorder %s170, %s171
      %p183 = scmp.eq.s32.totalorder %s30, 1
      %p184 = por %p182, %p183
      %p186 = scmp.ne.s32.totalorder %s171, %s185
      %p187 = scmp.eq.s32.totalorder %s30, 0
      %p188 = por %p186, %p187
      %s189 = ssub.s32 %s24, %s31
      %p190 = scmp.eq.s32.totalorder %s189, 0
      %s192 = sadd.s32 %s191, 1
      %s193 = scalar_select %p190, %s191, %s192
      %p196 = pneg %p190
      %p197 = scmp.eq.s32.totalorder %s24, 1
      %p198 = por %p196, %p197
      %p199 = scmp.ne.s32.totalorder %s191, %s194
      %p200 = scmp.eq.s32.totalorder %s24, 0
      %p201 = por %p199, %p200
      %p202 = scmp.ne.s32.totalorder %s191, %s194
      %p203 = scmp.eq.s32.totalorder %s29, 1
      %p204 = por %p202, %p203
      %p205 = scmp.ne.s32.totalorder %s194, %s195
      %p206 = scmp.eq.s32.totalorder %s29, 0
      %p207 = por %p205, %p206
      %p208 = scmp.ne.s32.totalorder %s194, %s195
      %p209 = scmp.eq.s32.totalorder %s30, 1
      %p210 = por %p208, %p209
      %p212 = scmp.ne.s32.totalorder %s195, %s211
      %p213 = scmp.eq.s32.totalorder %s30, 0
      %p214 = por %p212, %p213
      %p215 = scmp.le.s32.totalorder 1, %s24
      %p216 = scmp.lt.s32.totalorder %s24, 3
      %p217 = pnand %p215, %p216
      %p218 = pneg %p217
      // Predicated region
      $region9: #{tpu_custom_call.1} parent=5 // pred_check
        _
      $region10: #{tpu_custom_call.1} parent=5 // pred_check_branch
        %220 = sbr.rel (%p217) target = $region12
      $region11: #{tpu_custom_call.1} parent=5 // pred_region
        %s221 = ssub.s32 %s24, 1
        // Predicated region
        $region13: #{tpu_custom_call.1} parent=11 // pred_check
          %p222 = pneg %p45
        $region14: #{tpu_custom_call.1} parent=11 // pred_check_branch
          %224 = sbr.rel (%p222) target = $region16
        $region15: #{tpu_custom_call.1} parent=11 // pred_region
          %226 = vsyncadd [#allocation7], 0
          %s228 = sshll.u32 %s0, 4
          %s229 = int_to_ptr.hbm [resolvable:$true] %s228
          %231 = dma.hbm_to_smem %s229, 16, [#allocation4], [#allocation7]
        $region16: #{tpu_custom_call.1} parent=11 // pred_fallthru
          _
        // Predicated region
        $region17: #{tpu_custom_call.1} parent=11 // pred_check
          %p232 = pneg %p92
        $region18: #{tpu_custom_call.1} parent=11 // pred_check_branch
          %234 = sbr.rel (%p232) target = $region20
        $region19: #{tpu_custom_call.1} parent=11 // pred_region
          %236 = vsyncadd [#allocation10], 0
          %s237 = sshll.u32 %s2, 4
          %s238 = int_to_ptr.hbm [resolvable:$true] %s237
          %s239 = sshll.u32 [#allocation9], 4
          %s240 = int_to_ptr.vmem [resolvable:$true] %s239
          %245 = dma.hbm_to_vmem [thread:$0]  %s238, 2048, %s240, [#allocation10], 128, 128, 8
        $region20: #{tpu_custom_call.1} parent=11 // pred_fallthru
          _
        // Predicated region
        $region21: #{tpu_custom_call.1} parent=11 // pred_check
          %p246 = pneg %p113
        $region22: #{tpu_custom_call.1} parent=11 // pred_check_branch
          %248 = sbr.rel (%p246) target = $region24
        $region23: #{tpu_custom_call.1} parent=11 // pred_region
          %250 = vsyncadd [#allocation10], 0
          %s252 = sshll.u32 %s3, 4
          %s253 = int_to_ptr.hbm [resolvable:$true] %s252
          %s254 = sshll.u32 [#allocation11], 4
          %s255 = int_to_ptr.vmem [resolvable:$true] %s254
          %257 = dma.hbm_to_vmem [thread:$0]  %s253, 128, %s255, [#allocation10]
        $region24: #{tpu_custom_call.1} parent=11 // pred_fallthru
          _
        // Predicated region
        $region25: #{tpu_custom_call.1} parent=11 // pred_check
          %p258 = pneg %p160
        $region26: #{tpu_custom_call.1} parent=11 // pred_check_branch
          %260 = sbr.rel (%p258) target = $region28
        $region27: #{tpu_custom_call.1} parent=11 // pred_region
          %262 = vsyncadd [#allocation13], 0
          %s263 = sshll.u32 %s5, 4
          %s264 = int_to_ptr.hbm [resolvable:$true] %s263
          %s265 = sshll.u32 [#allocation14], 4
          %s266 = int_to_ptr.vmem [resolvable:$true] %s265
          %271 = dma.hbm_to_vmem [thread:$0]  %s264, 128, %s266, [#allocation13], 64, 64, 4
        $region28: #{tpu_custom_call.1} parent=11 // pred_fallthru
          _
        // Predicated region
        $region29: #{tpu_custom_call.1} parent=11 // pred_check
          %p272 = pneg %p181
        $region30: #{tpu_custom_call.1} parent=11 // pred_check_branch
          %274 = sbr.rel (%p272) target = $region32
        $region31: #{tpu_custom_call.1} parent=11 // pred_region
          _
        $region32: #{tpu_custom_call.1} parent=11 // pred_fallthru
          _
      $region12: #{tpu_custom_call.1} parent=5 // pred_fallthru
        _
      %p275 = scmp.lt.s32.totalorder %s24, 2
      // Predicated region
      $region33: #{tpu_custom_call.1} parent=5 // pred_check
        %p276 = pneg %p275
      $region34: #{tpu_custom_call.1} parent=5 // pred_check_branch
        %278 = sbr.rel (%p276) target = $region36
      $region35: #{tpu_custom_call.1} parent=5 // pred_region
        // Predicated region
        $region37: #{tpu_custom_call.1} parent=35 // pred_check
          %p279 = pneg %p65
        $region38: #{tpu_custom_call.1} parent=35 // pred_check_branch
          %281 = sbr.rel (%p279) target = $region40
        $region39: #{tpu_custom_call.1} parent=35 // pred_region
          %s282 = sand.u32 %s55, 1
          %s283 = scalar_lea.sflag [#allocation5], %s282
          %s284 = sand.u32 %s55, 1
          %s285 = smul.addr %s284, 4
          %s286 = scalar_lea.vmem [#allocation8], %s285
          %288 = vsyncadd %s283, 0
          %s289 = smul.addr %s24, 4
          %s290 = scalar_lea.hbm %s1, %s289
          %s292 = sshll.u32 %s290, 4
          %s293 = int_to_ptr.hbm [resolvable:$true] %s292
          %s294 = sshll.u32 %s286, 4
          %s295 = int_to_ptr.vmem [resolvable:$true] %s294
          %297 = dma.hbm_to_vmem [thread:$0]  %s293, 64, %s295, %s283
        $region40: #{tpu_custom_call.1} parent=35 // pred_fallthru
          _
        // Predicated region
        $region41: #{tpu_custom_call.1} parent=35 // pred_check
          %p298 = pneg %p133
        $region42: #{tpu_custom_call.1} parent=35 // pred_check_branch
          %300 = sbr.rel (%p298) target = $region44
        $region43: #{tpu_custom_call.1} parent=35 // pred_region
          %s301 = sand.u32 %s24, 1
          %s302 = scalar_lea.sflag [#allocation13], %s301
          %s303 = sand.u32 %s123, 1
          %s304 = smul.addr %s303, 8
          %s305 = scalar_lea.vmem [#allocation12], %s304
          %307 = vsyncadd %s302, 0
          %s308 = smul.addr %s24, 2
          %s309 = smul.addr %s308, 4
          %s310 = scalar_lea.hbm %s4, %s309
          %s312 = sshll.u32 %s310, 4
          %s313 = int_to_ptr.hbm [resolvable:$true] %s312
          %s314 = sshll.u32 %s305, 4
          %s315 = int_to_ptr.vmem [resolvable:$true] %s314
          %317 = dma.hbm_to_vmem [thread:$0]  %s313, 128, %s315, %s302
        $region44: #{tpu_custom_call.1} parent=35 // pred_fallthru
          _
      $region36: #{tpu_custom_call.1} parent=5 // pred_fallthru
        _
      %p318 = scmp.le.s32.totalorder 1, %s24
      %p319 = scmp.lt.s32.totalorder %s24, 3
      %p320 = pnand %p318, %p319
      %p321 = pneg %p320
      // Predicated region
      $region45: #{tpu_custom_call.1} parent=5 // pred_check
        _
      $region46: #{tpu_custom_call.1} parent=5 // pred_check_branch
        %323 = sbr.rel (%p320) target = $region48
      $region47: #{tpu_custom_call.1} parent=5 // pred_region
        %s324 = ssub.s32 %s24, 1
        // Predicated region
        $region49: #{tpu_custom_call.1} parent=47 // pred_check
          %p325 = pneg %p45
        $region50: #{tpu_custom_call.1} parent=47 // pred_check_branch
          %327 = sbr.rel (%p325) target = $region52
        $region51: #{tpu_custom_call.1} parent=47 // pred_region
          %329 = dma.done [#allocation7], 16
        $region52: #{tpu_custom_call.1} parent=47 // pred_fallthru
          _
        %s330 = sand.u32 %s58, 1
        %s331 = scalar_lea.sflag [#allocation5], %s330
        %s332 = sand.u32 %s58, 1
        %s333 = smul.addr %s332, 4
        %s334 = scalar_lea.vmem [#allocation8], %s333
        // Predicated region
        $region53: #{tpu_custom_call.1} parent=47 // pred_check
          %p335 = pneg %p71
        $region54: #{tpu_custom_call.1} parent=47 // pred_check_branch
          %337 = sbr.rel (%p335) target = $region56
        $region55: #{tpu_custom_call.1} parent=47 // pred_region
          %339 = dma.done %s331, 64
        $region56: #{tpu_custom_call.1} parent=47 // pred_fallthru
          _
        // Predicated region
        $region57: #{tpu_custom_call.1} parent=47 // pred_check
          %p340 = pneg %p92
        $region58: #{tpu_custom_call.1} parent=47 // pred_check_branch
          %342 = sbr.rel (%p340) target = $region60
        $region59: #{tpu_custom_call.1} parent=47 // pred_region
          %344 = dma.done [#allocation10], 2048
        $region60: #{tpu_custom_call.1} parent=47 // pred_fallthru
          _
        // Predicated region
        $region61: #{tpu_custom_call.1} parent=47 // pred_check
          %p345 = pneg %p113
        $region62: #{tpu_custom_call.1} parent=47 // pred_check_branch
          %347 = sbr.rel (%p345) target = $region64
        $region63: #{tpu_custom_call.1} parent=47 // pred_region
          %349 = dma.done [#allocation10], 128
        $region64: #{tpu_custom_call.1} parent=47 // pred_fallthru
          _
        %s350 = sand.u32 %s29, 1
        %s351 = scalar_lea.sflag [#allocation13], %s350
        %s352 = sand.u32 %s126, 1
        %s353 = smul.addr %s352, 8
        %s354 = scalar_lea.vmem [#allocation12], %s353
        // Predicated region
        $region65: #{tpu_custom_call.1} parent=47 // pred_check
          %p355 = pneg %p139
        $region66: #{tpu_custom_call.1} parent=47 // pred_check_branch
          %357 = sbr.rel (%p355) target = $region68
        $region67: #{tpu_custom_call.1} parent=47 // pred_region
          %359 = dma.done %s351, 128
        $region68: #{tpu_custom_call.1} parent=47 // pred_fallthru
          _
        // Predicated region
        $region69: #{tpu_custom_call.1} parent=47 // pred_check
          %p360 = pneg %p160
        $region70: #{tpu_custom_call.1} parent=47 // pred_check_branch
          %362 = sbr.rel (%p360) target = $region72
        $region71: #{tpu_custom_call.1} parent=47 // pred_region
          %364 = dma.done [#allocation13], 128
        $region72: #{tpu_custom_call.1} parent=47 // pred_fallthru
          _
        %365 = sfence
        %p366 = pneg %p45
        %p367 = pneg %p42
        %s368 = sand.u32 %s58, 1
        %s369 = scalar_lea.sflag [#allocation5], %s368
        %s370 = sand.u32 %s58, 1
        %s371 = smul.addr %s370, 4
        %s372 = scalar_lea.vmem [#allocation8], %s371
        %p373 = pneg %p71
        %p374 = pneg %p68
        %p375 = pneg %p92
        %p376 = pneg %p89
        %p377 = pneg %p113
        %p378 = pneg %p110
        %s379 = sand.u32 %s29, 1
        %s380 = scalar_lea.sflag [#allocation13], %s379
        %s381 = sand.u32 %s126, 1
        %s382 = smul.addr %s381, 8
        %s383 = scalar_lea.vmem [#allocation12], %s382
        %p384 = pneg %p139
        %p385 = pneg %p136
        %p386 = pneg %p160
        %p387 = pneg %p157
        %p388 = pneg %p181
        %p389 = pneg %p178
        %p390 = pneg %p207
        %p391 = pneg %p204
        %s392 = sand.u32 %s194, 1
        %s393 = scalar_lea.sflag [#allocation6], %s392
        %s394 = sand.u32 %s194, 1
        %s395 = smul.addr %s394, 8
        %s396 = scalar_lea.vmem [#allocation15], %s395
        %v398 = vld [vmem:[%s6] sm:$0xf]
        %v399 = vld [vmem:[%s334] sm:$0xf]
        %v400 = vpack.c.bf16 %v399, %v399
        %v401 = vld [vmem:[#allocation9] sm:$0xff]
        %v402 = vld [vmem:[#allocation9 + $0x8] sm:$0xff]
        %v403 = vld [vmem:[#allocation9 + $0x10] sm:$0xff]
        %v404 = vld [vmem:[#allocation9 + $0x18] sm:$0xff]
        %v405 = vld [vmem:[#allocation9 + $0x20] sm:$0xff]
        %v406 = vld [vmem:[#allocation9 + $0x28] sm:$0xff]
        %v407 = vld [vmem:[#allocation9 + $0x30] sm:$0xff]
        %v408 = vld [vmem:[#allocation9 + $0x38] sm:$0xff]
        %v409 = vld [vmem:[#allocation9 + $0x40] sm:$0xff]
        %v410 = vld [vmem:[#allocation9 + $0x48] sm:$0xff]
        %v411 = vld [vmem:[#allocation9 + $0x50] sm:$0xff]
        %v412 = vld [vmem:[#allocation9 + $0x58] sm:$0xff]
        %v413 = vld [vmem:[#allocation9 + $0x60] sm:$0xff]
        %v414 = vld [vmem:[#allocation9 + $0x68] sm:$0xff]
        %v415 = vld [vmem:[#allocation9 + $0x70] sm:$0xff]
        %v416 = vld [vmem:[#allocation9 + $0x78] sm:$0xff]
        %v417 = vld [vmem:[#allocation11] sm:$0xff]
        %v434 = vunpack.c.l.b16 %v401
        %v435 = vunpack.c.h.b16 %v401
        %v436 = vunpack.c.l.b16 %v402
        %v437 = vunpack.c.h.b16 %v402
        %v438 = vunpack.c.l.b16 %v403
        %v439 = vunpack.c.h.b16 %v403
        %v440 = vunpack.c.l.b16 %v404
        %v441 = vunpack.c.h.b16 %v404
        %v442 = vunpack.c.l.b16 %v405
        %v443 = vunpack.c.h.b16 %v405
        %v444 = vunpack.c.l.b16 %v406
        %v445 = vunpack.c.h.b16 %v406
        %v446 = vunpack.c.l.b16 %v407
        %v447 = vunpack.c.h.b16 %v407
        %v448 = vunpack.c.l.b16 %v408
        %v449 = vunpack.c.h.b16 %v408
        %v450 = vunpack.c.l.b16 %v409
        %v451 = vunpack.c.h.b16 %v409
        %v452 = vunpack.c.l.b16 %v410
        %v453 = vunpack.c.h.b16 %v410
        %v454 = vunpack.c.l.b16 %v411
        %v455 = vunpack.c.h.b16 %v411
        %v456 = vunpack.c.l.b16 %v412
        %v457 = vunpack.c.h.b16 %v412
        %v458 = vunpack.c.l.b16 %v413
        %v459 = vunpack.c.h.b16 %v413
        %v460 = vunpack.c.l.b16 %v414
        %v461 = vunpack.c.h.b16 %v414
        %v462 = vunpack.c.l.b16 %v415
        %v463 = vunpack.c.h.b16 %v415
        %v464 = vunpack.c.l.b16 %v416
        %v465 = vunpack.c.h.b16 %v416
        %v466 = vpack.c.b16 %v436, %v434
        %v467 = vpack.c.b16 %v437, %v435
        %v468 = vpack.c.b16 %v440, %v438
        %v469 = vpack.c.b16 %v441, %v439
        %v470 = vpack.c.b16 %v444, %v442
        %v471 = vpack.c.b16 %v445, %v443
        %v472 = vpack.c.b16 %v448, %v446
        %v473 = vpack.c.b16 %v449, %v447
        %v474 = vpack.c.b16 %v452, %v450
        %v475 = vpack.c.b16 %v453, %v451
        %v476 = vpack.c.b16 %v456, %v454
        %v477 = vpack.c.b16 %v457, %v455
        %v478 = vpack.c.b16 %v460, %v458
        %v479 = vpack.c.b16 %v461, %v459
        %v480 = vpack.c.b16 %v464, %v462
        %v481 = vpack.c.b16 %v465, %v463
        %499 = vst [vmem:[#allocation1] ss:$2 sm:$0xff] %v417
        %v500 = vld.sshfl [vmem:[#allocation1] sm:$0xff pattern:$0x75316420]
        %v501 = vld.sshfl [vmem:[#allocation1 + $0x8] sm:$0xff pattern:$0x75316420]
        %504 = vmatpush.bf16.msra.mxu0 %v480
        %505 = vmatpush.bf16.msra.mxu0 %v478
        %506 = vmatpush.bf16.msra.mxu0 %v476
        %507 = vmatpush.bf16.msra.mxu0 %v474
        %508 = vmatpush.bf16.msra.mxu0 %v472
        %509 = vmatpush.bf16.msra.mxu0 %v470
        %510 = vmatpush.bf16.msra.mxu0 %v468
        %511 = vmatpush.bf16.msra.mxu0 %v466
        %512 = vmatmul.bf16.gmra.mxu0 %v400
        %v513 = vpop.f32.mrf.mxu0
        %v514 = vadd.f32 %v500, %v513
        %v515 = vpop.f32.mrf.mxu0
        %516 = vdwg.mxu0
        %517 = vmatpush.bf16.msra.mxu0 %v481
        %518 = vmatpush.bf16.msra.mxu0 %v479
        %519 = vmatpush.bf16.msra.mxu0 %v477
        %520 = vmatpush.bf16.msra.mxu0 %v475
        %521 = vmatpush.bf16.msra.mxu0 %v473
        %522 = vmatpush.bf16.msra.mxu0 %v471
        %523 = vmatpush.bf16.msra.mxu0 %v469
        %524 = vmatpush.bf16.msra.mxu0 %v467
        %525 = vmatmul.bf16.gmra.mxu0 %v400
        %v526 = vpop.f32.mrf.mxu0
        %v527 = vadd.f32 %v501, %v526
        %v528 = vpop.f32.mrf.mxu0
        %529 = vdwg.mxu0
        %vm530 = vcmask 1043456
        %v531 = vsel %vm530, %v514, 0.0
        %v532 = vsel %vm530, %v527, 0.0
        %v533 = vadd.f32 %v531, %v532
        %534 = vadd.xlane.f32.xlu0 %v533
        %v535 = vpop.xlane.xlu0 %534
        %v536 = vmul.f32 %v535, 0.00390625
        %v537 = vmul.f32 %v514, %v514
        %v538 = vmul.f32 %v527, %v527
        %v539 = vsel %vm530, %v537, 0.0
        %v540 = vsel %vm530, %v538, 0.0
        %v541 = vadd.f32 %v539, %v540
        %542 = vadd.xlane.f32.xlu0 %v541
        %v543 = vpop.xlane.xlu0 %542
        %v544 = vmul.f32 %v543, 0.00390625
        %v545 = vmul.f32 %v536, %v536
        %v546 = vsub.f32 %v544, %v545
        %v547 = vsub.f32 %v514, %v536
        %v548 = vsub.f32 %v527, %v536
        %v549 = vadd.f32 %v546, 1e-05
        %v550 = vrsqrt.pop %v549
        %v551 = vmul.f32 %v550, %v549
        %v552 = vmul.f32 %v551, %v550
        %v553 = vmul.f32 0.5, %v552
        %v554 = vsub.f32 1.5, %v553
        %v555 = vmul.f32 %v550, %v554
        %vm556 = vweird.f32 %v549
        %vm557 = vweird.f32 %v550
        %vm558 = vmor %vm556, %vm557
        %v559 = vsel %vm558, %v550, %v555
        %v560 = vmul.f32 %v547, %v559
        %v561 = vmul.f32 %v548, %v559
        %563 = vset.pattern.permute.xlu0 0
        %564 = vperm.xlu0 %563, %v398
        %v565 = vpop.permute.xlu0 %564
        %v567 = vmul.f32 %v560, %v565
        %v568 = vmul.f32 %v561, %v565
        %569 = vset.pattern.permute.xlu0 1
        %570 = vperm.xlu0 %569, %v398
        %v571 = vpop.permute.xlu0 %570
        %v573 = vadd.f32 %v567, %v571
        %v574 = vadd.f32 %v568, %v571
        %v575 = vld [vmem:[%s354] sm:$0xff]
        %577 = vst [vmem:[#allocation1] ss:$2 sm:$0xff] %v575
        %v578 = vld.sshfl [vmem:[#allocation1] sm:$0xff pattern:$0x75316420]
        %v579 = vld.sshfl [vmem:[#allocation1 + $0x8] sm:$0xff pattern:$0x75316420]
        %582 = vst [vmem:[#allocation2] sm:$0xf] %v578
        %583 = vst [vmem:[#allocation2 + $0x8] sm:$0xf] %v579
        %v586 = vrot.slane %v573, 4
        %v587 = vrot.slane %v574, 4
        %590 = vst [vmem:[#allocation2] sm:$0xf0] %v586
        %591 = vst [vmem:[#allocation2 + $0x8] sm:$0xf0] %v587
        %v592 = vld [vmem:[#allocation2] sm:$0xff]
        %v593 = vld [vmem:[#allocation2 + $0x8] sm:$0xff]
        %v594 = vlaneseq
        %v595 = vand.u32 %v594, 127
        %v596 = vadd.s32 %v595, 128
        %v597 = vand.u32 %v595, 15
        %v598 = vand.u32 %v596, 15
        %599 = vrot.lane.b32.xlu0 %v592, 17
        %v600 = vpop.permute.xlu0 %599
        %601 = vrot.lane.b32.xlu0 %v593, 17
        %v602 = vpop.permute.xlu0 %601
        %vm603 = vcmp.lt.s32.totalorder %v595, 17
        %v604 = vsel %vm603, %v600, %v602
        %v605 = vsel %vm603, %v602, %v600
        %vm606 = vcmp.ge.s32.totalorder %v595, 16
        %vm607 = vcmp.ge.s32.totalorder %v596, 16
        %vm608 = vcmp.ge.s32.totalorder %v597, 1
        %vm609 = vcmp.ge.s32.totalorder %v598, 1
        %vm610 = vmand %vm606, %vm608
        %vm611 = vmand %vm607, %vm609
        %v612 = vsel %vm610, %v605, 0.0
        %v613 = vsel %vm611, %v604, 0.0
        %614 = vst [vmem:[#allocation3] sm:$0xff] %v612
        %615 = vst [vmem:[#allocation3 + $0x8] sm:$0xff] %v613
        %616 = vrot.lane.b32.xlu0 %v592, 16
        %v617 = vpop.permute.xlu0 %616
        %618 = vrot.lane.b32.xlu0 %v593, 16
        %v619 = vpop.permute.xlu0 %618
        %vm620 = vcmp.lt.s32.totalorder %v595, 16
        %v621 = vsel %vm620, %v617, %v619
        %v622 = vsel %vm620, %v619, %v617
        %v623 = vsel %vm606, %v622, 0.0
        %v624 = vsel %vm607, %v621, 0.0
        %625 = vst [vmem:[#allocation3 + $0x10] sm:$0xff] %v623
        %626 = vst [vmem:[#allocation3 + $0x18] sm:$0xff] %v624
        %627 = vrot.lane.b32.xlu0 %v592, 15
        %v628 = vpop.permute.xlu0 %627
        %629 = vrot.lane.b32.xlu0 %v593, 15
        %v630 = vpop.permute.xlu0 %629
        %vm631 = vcmp.lt.s32.totalorder %v595, 15
        %v632 = vsel %vm631, %v628, %v630
        %v633 = vsel %vm631, %v630, %v628
        %vm634 = vcmp.lt.s32.totalorder %v597, 15
        %vm635 = vcmp.lt.s32.totalorder %v598, 15
        %vm636 = vmand %vm606, %vm634
        %vm637 = vmand %vm607, %vm635
        %v638 = vsel %vm636, %v633, 0.0
        %v639 = vsel %vm637, %v632, 0.0
        %640 = vst [vmem:[#allocation3 + $0x20] sm:$0xff] %v638
        %641 = vst [vmem:[#allocation3 + $0x28] sm:$0xff] %v639
        %642 = vrot.lane.b32.xlu0 %v592, 1
        %v643 = vpop.permute.xlu0 %642
        %644 = vrot.lane.b32.xlu0 %v593, 1
        %v645 = vpop.permute.xlu0 %644
        %vm646 = vcmp.lt.s32.totalorder %v595, 1
        %v647 = vsel %vm646, %v643, %v645
        %v648 = vsel %vm646, %v645, %v643
        %v649 = vsel %vm608, %v648, 0.0
        %v650 = vsel %vm609, %v647, 0.0
        %651 = vst [vmem:[#allocation3 + $0x30] sm:$0xff] %v649
        %652 = vst [vmem:[#allocation3 + $0x38] sm:$0xff] %v650
        %653 = vst [vmem:[#allocation3 + $0x40] sm:$0xff] %v592
        %654 = vst [vmem:[#allocation3 + $0x48] sm:$0xff] %v593
        %655 = vrot.lane.b32.xlu0 %v592, 127
        %v656 = vpop.permute.xlu0 %655
        %657 = vrot.lane.b32.xlu0 %v593, 127
        %v658 = vpop.permute.xlu0 %657
        %vm659 = vcmp.lt.s32.totalorder %v595, 127
        %v660 = vsel %vm659, %v656, %v658
        %v661 = vsel %vm659, %v658, %v656
        %v662 = vsel %vm634, %v660, 0.0
        %v663 = vsel %vm635, %v661, 0.0
        %664 = vst [vmem:[#allocation3 + $0x50] sm:$0xff] %v662
        %665 = vst [vmem:[#allocation3 + $0x58] sm:$0xff] %v663
        %666 = vrot.lane.b32.xlu0 %v592, 113
        %v667 = vpop.permute.xlu0 %666
        %668 = vrot.lane.b32.xlu0 %v593, 113
        %v669 = vpop.permute.xlu0 %668
        %vm670 = vcmp.lt.s32.totalorder %v595, 113
        %v671 = vsel %vm670, %v667, %v669
        %v672 = vsel %vm670, %v669, %v667
        %vm673 = vcmp.lt.s32.totalorder %v595, 240
        %vm674 = vcmp.lt.s32.totalorder %v596, 240
        %vm675 = vmand %vm673, %vm608
        %vm676 = vmand %vm674, %vm609
        %v677 = vsel %vm675, %v671, 0.0
        %v678 = vsel %vm676, %v672, 0.0
        %679 = vst [vmem:[#allocation3 + $0x60] sm:$0xff] %v677
        %680 = vst [vmem:[#allocation3 + $0x68] sm:$0xff] %v678
        %681 = vrot.lane.b32.xlu0 %v592, 112
        %v682 = vpop.permute.xlu0 %681
        %683 = vrot.lane.b32.xlu0 %v593, 112
        %v684 = vpop.permute.xlu0 %683
        %vm685 = vcmp.lt.s32.totalorder %v595, 112
        %v686 = vsel %vm685, %v682, %v684
        %v687 = vsel %vm685, %v684, %v682
        %v688 = vsel %vm673, %v686, 0.0
        %v689 = vsel %vm674, %v687, 0.0
        %690 = vst [vmem:[#allocation3 + $0x70] sm:$0xff] %v688
        %691 = vst [vmem:[#allocation3 + $0x78] sm:$0xff] %v689
        %692 = vrot.lane.b32.xlu0 %v592, 111
        %v693 = vpop.permute.xlu0 %692
        %694 = vrot.lane.b32.xlu0 %v593, 111
        %v695 = vpop.permute.xlu0 %694
        %vm696 = vcmp.lt.s32.totalorder %v595, 111
        %v697 = vsel %vm696, %v693, %v695
        %v698 = vsel %vm696, %v695, %v693
        %vm699 = vmand %vm673, %vm634
        %vm700 = vmand %vm674, %vm635
        %v701 = vsel %vm699, %v697, 0.0
        %v702 = vsel %vm700, %v698, 0.0
        %703 = vst [vmem:[#allocation3 + $0x80] sm:$0xff] %v701
        %704 = vst [vmem:[#allocation3 + $0x88] sm:$0xff] %v702
        %v705 = vld [vmem:[#allocation14] sm:$0xf]
        %v706 = vld [vmem:[#allocation14 + $0x4] sm:$0x3]
        %v707 = vld [vmem:[#allocation3] sm:$0xff]
        %v708 = vld [vmem:[#allocation3 + $0x8] sm:$0xff]
        %v709 = vld [vmem:[#allocation3 + $0x10] sm:$0xff]
        %v710 = vld [vmem:[#allocation3 + $0x18] sm:$0xff]
        %v711 = vld [vmem:[#allocation3 + $0x20] sm:$0xff]
        %v712 = vld [vmem:[#allocation3 + $0x28] sm:$0xff]
        %v713 = vld [vmem:[#allocation3 + $0x30] sm:$0xff]
        %v714 = vld [vmem:[#allocation3 + $0x38] sm:$0xff]
        %v715 = vld [vmem:[#allocation3 + $0x40] sm:$0xff]
        %v716 = vld [vmem:[#allocation3 + $0x48] sm:$0xff]
        %v717 = vld [vmem:[#allocation3 + $0x50] sm:$0xff]
        %v718 = vld [vmem:[#allocation3 + $0x58] sm:$0xff]
        %v719 = vld [vmem:[#allocation3 + $0x60] sm:$0xff]
        %v720 = vld [vmem:[#allocation3 + $0x68] sm:$0xff]
        %v721 = vld [vmem:[#allocation3 + $0x70] sm:$0xff]
        %v722 = vld [vmem:[#allocation3 + $0x78] sm:$0xff]
        %v723 = vld [vmem:[#allocation3 + $0x80] sm:$0xff]
        %v724 = vld [vmem:[#allocation3 + $0x88] sm:$0xff]
        %v725 = vpack.c.bf16 %v709, %v707
        %v726 = vpack.c.bf16 %v710, %v708
        %v727 = vpack.c.bf16 %v713, %v711
        %v728 = vpack.c.bf16 %v714, %v712
        %v729 = vpack.c.bf16 %v717, %v715
        %v730 = vpack.c.bf16 %v718, %v716
        %v731 = vpack.c.bf16 %v721, %v719
        %v732 = vpack.c.bf16 %v722, %v720
        %v733 = vpack.c.bf16 %v723, %v723
        %v734 = vpack.c.bf16 %v724, %v724
        %v737 = vunpack.c.l.b16 %v705
        %v738 = vunpack.c.l.b16 %v706
        %v739 = vpack.c.b16 %v738, %v737
        %vm740 = vcmask 588800
        %v742 = vsel %vm740, %v739, 0
        %v745 = vsel %vm530, %v733, 0
        %v748 = vsel %vm530, %v734, 0
        %750 = vmatpush.bf16.msra.mxu0 0
        %751 = vmatpush.bf16.msra.mxu0 0
        %752 = vmatpush.bf16.msra.mxu0 0
        %753 = vmatpush.bf16.msra.mxu0 %v745
        %754 = vmatpush.bf16.msra.mxu0 %v731
        %755 = vmatpush.bf16.msra.mxu0 %v729
        %756 = vmatpush.bf16.msra.mxu0 %v727
        %757 = vmatpush.bf16.msra.mxu0 %v725
        %758 = vmatmul.bf16.gmra.mxu0 %v742
        %v759 = vpop.f32.mrf.mxu0
        %v760 = vadd.f32 0.0, %v759
        %v761 = vpop.f32.mrf.mxu0
        %v762 = vadd.f32 0.0, %v761
        %763 = vdwg.mxu0
        %764 = vmatpush.bf16.msra.mxu0 0
        %765 = vmatpush.bf16.msra.mxu0 0
        %766 = vmatpush.bf16.msra.mxu0 0
        %767 = vmatpush.bf16.msra.mxu0 %v748
        %768 = vmatpush.bf16.msra.mxu0 %v732
        %769 = vmatpush.bf16.msra.mxu0 %v730
        %770 = vmatpush.bf16.msra.mxu0 %v728
        %771 = vmatpush.bf16.msra.mxu0 %v726
        %772 = vmatmul.bf16.gmra.mxu0 %v742
        %v773 = vpop.f32.mrf.mxu0
        %v774 = vadd.f32 0.0, %v773
        %v775 = vpop.f32.mrf.mxu0
        %v776 = vadd.f32 0.0, %v775
        %777 = vdwg.mxu0
        %v778 = vpack.c.bf16 %v760, %v760
        %v779 = vpack.c.bf16 %v774, %v774
        %v782 = vrot.slane %v778, 2
        %v783 = vrot.slane %v779, 2
        %786 = vmatpush.bf16.xpose.msra.mxu0 0
        %787 = vmatpush.bf16.xpose.msra.mxu0 0
        %788 = vmatpush.bf16.xpose.msra.mxu0 0
        %789 = vmatpush.bf16.xpose.msra.mxu0 0
        %790 = vmatpush.bf16.xpose.msra.mxu0 0
        %791 = vmatpush.bf16.xpose.msra.mxu0 0
        %792 = vmatpush.bf16.xpose.msra.mxu0 0
        %793 = vmatpush.bf16.xpose.msra.mxu0 %v782
        %794 = vmatmul.bf16.gmra.mxu0 %v778
        %v795 = vpop.f32.mrf.mxu0
        %v796 = vadd.f32 0.0, %v795
        %v797 = vpop.f32.mrf.mxu0
        %798 = vdwg.mxu0
        %799 = vmatpush.bf16.xpose.msra.mxu0 0
        %800 = vmatpush.bf16.xpose.msra.mxu0 0
        %801 = vmatpush.bf16.xpose.msra.mxu0 0
        %802 = vmatpush.bf16.xpose.msra.mxu0 0
        %803 = vmatpush.bf16.xpose.msra.mxu0 0
        %804 = vmatpush.bf16.xpose.msra.mxu0 0
        %805 = vmatpush.bf16.xpose.msra.mxu0 0
        %806 = vmatpush.bf16.xpose.msra.mxu0 %v783
        %807 = vmatmul.bf16.gmra.mxu0 %v779
        %v808 = vpop.f32.mrf.mxu0
        %v809 = vadd.f32 %v796, %v808
        %v810 = vpop.f32.mrf.mxu0
        %811 = vdwg.mxu0
        %v812 = vmul.f32 %v809, 0.0625
        %813 = vrot.lane.b32.xlu0 %v398, 124
        %v814 = vpop.permute.xlu0 %813
        %v816 = vadd.f32 %v812, %v814
        %vm817 = vcmask 27648
        %v818 = vsel %vm817, %v816, -inf
        %819 = vmax.xlane.f32.xlu0 %v818
        %v820 = vpop.xlane.xlu0 %819
        %v821 = vsub.f32 %v816, %v820
        %v822 = vmul.f32 %v821, 1.442695
        %v823 = vpow.pop %v822
        %v824 = vsel %vm817, %v823, 0.0
        %825 = vadd.xlane.f32.xlu0 %v824
        %v826 = vpop.xlane.xlu0 %825
        %v827 = vrcp.pop %v826
        %v828 = vmul.f32 %v826, %v827
        %v829 = vsub.f32 1.0, %v828
        %v830 = vmul.f32 %v827, %v829
        %v831 = vadd.f32 %v827, %v830
        %vm832 = vweird.f32 %v826
        %vm833 = vweird.f32 %v827
        %vm834 = vmor %vm832, %vm833
        %v835 = vsel %vm834, %v827, %v831
        %v836 = vand.u32 2147483647, %v826
        %vm837 = vcmp.eq.f32.partialorder %v836, 8.507059e+37
        %v838 = vand.u32 %v826, 2147483648
        %v839 = vor.u32 1.1754944e-38, %v838
        %v840 = vsel %vm837, %v839, %v835
        %v841 = vmul.f32 %v823, %v840
        %v842 = vpack.c.bf16 %v841, %v841
        %v843 = vpack.c.bf16 %v762, %v762
        %v844 = vpack.c.bf16 %v776, %v776
        %vm845 = vcmask 31744
        %v847 = vsel %vm845, %v842, 0
        %vm849 = vcmask 1041408
        %v851 = vsel %vm849, %v843, 0
        %v854 = vsel %vm849, %v844, 0
        %856 = vmatpush.bf16.msra.mxu0 0
        %857 = vmatpush.bf16.msra.mxu0 0
        %858 = vmatpush.bf16.msra.mxu0 0
        %859 = vmatpush.bf16.msra.mxu0 0
        %860 = vmatpush.bf16.msra.mxu0 0
        %861 = vmatpush.bf16.msra.mxu0 0
        %862 = vmatpush.bf16.msra.mxu0 0
        %863 = vmatpush.bf16.msra.mxu0 %v851
        %864 = vmatmul.bf16.gmra.mxu0 %v847
        %v865 = vpop.f32.mrf.mxu0
        %v866 = vadd.f32 0.0, %v865
        %v867 = vpop.f32.mrf.mxu0
        %868 = vdwg.mxu0
        %869 = vmatpush.bf16.msra.mxu0 0
        %870 = vmatpush.bf16.msra.mxu0 0
        %871 = vmatpush.bf16.msra.mxu0 0
        %872 = vmatpush.bf16.msra.mxu0 0
        %873 = vmatpush.bf16.msra.mxu0 0
        %874 = vmatpush.bf16.msra.mxu0 0
        %875 = vmatpush.bf16.msra.mxu0 0
        %876 = vmatpush.bf16.msra.mxu0 %v854
        %877 = vmatmul.bf16.gmra.mxu0 %v847
        %v878 = vpop.f32.mrf.mxu0
        %v879 = vadd.f32 0.0, %v878
        %v880 = vpop.f32.mrf.mxu0
        %881 = vdwg.mxu0
        %v884 = vrot.slane %v879, 4
        %v885 = vsel %vm530, %v866, %v884
        %v887 = vadd.f32 %v575, %v885
        %889 = vst [vmem:[#allocation1] ss:$2 sm:$0xff] %v887
        %v890 = vld.sshfl [vmem:[#allocation1] sm:$0xff pattern:$0x75316420]
        %v891 = vld.sshfl [vmem:[#allocation1 + $0x8] sm:$0xff pattern:$0x75316420]
        %v894 = vsel %vm530, %v890, 0.0
        %v895 = vsel %vm530, %v891, 0.0
        %v896 = vadd.f32 %v894, %v895
        %897 = vadd.xlane.f32.xlu0 %v896
        %v898 = vpop.xlane.xlu0 %897
        %v899 = vmul.f32 %v898, 0.00390625
        %v900 = vmul.f32 %v887, %v887
        %902 = vst [vmem:[#allocation1] ss:$2 sm:$0xff] %v900
        %v903 = vld.sshfl [vmem:[#allocation1] sm:$0xff pattern:$0x75316420]
        %v904 = vld.sshfl [vmem:[#allocation1 + $0x8] sm:$0xff pattern:$0x75316420]
        %v907 = vsel %vm530, %v903, 0.0
        %v908 = vsel %vm530, %v904, 0.0
        %v909 = vadd.f32 %v907, %v908
        %910 = vadd.xlane.f32.xlu0 %v909
        %v911 = vpop.xlane.xlu0 %910
        %v912 = vmul.f32 %v911, 0.00390625
        %v913 = vmul.f32 %v899, %v899
        %v914 = vsub.f32 %v912, %v913
        %v917 = vunpack.c.l.s4 839922192
        %v918 = vunpack.c.0.s8 %v917
        %v919 = vperm.slane %v899, %v918
        %v921 = vsub.f32 %v887, %v919
        %v922 = vadd.f32 %v914, 1e-05
        %v923 = vrsqrt.pop %v922
        %v924 = vmul.f32 %v923, %v922
        %v925 = vmul.f32 %v924, %v923
        %v926 = vmul.f32 0.5, %v925
        %v927 = vsub.f32 1.5, %v926
        %v928 = vmul.f32 %v923, %v927
        %vm929 = vweird.f32 %v922
        %vm930 = vweird.f32 %v923
        %vm931 = vmor %vm929, %vm930
        %v932 = vsel %vm931, %v923, %v928
        %v935 = vunpack.c.l.s4 839922192
        %v936 = vunpack.c.0.s8 %v935
        %v937 = vperm.slane %v932, %v936
        %v939 = vmul.f32 %v921, %v937
        %940 = vset.pattern.permute.xlu0 2
        %941 = vperm.xlu0 %940, %v398
        %v942 = vpop.permute.xlu0 %941
        %v944 = vunpack.c.l.s4 839922192
        %v945 = vunpack.c.0.s8 %v944
        %v946 = vperm.slane %v942, %v945
        %v948 = vmul.f32 %v939, %v946
        %949 = vset.pattern.permute.xlu0 3
        %950 = vperm.xlu0 %949, %v398
        %v951 = vpop.permute.xlu0 %950
        %v953 = vunpack.c.l.s4 839922192
        %v954 = vunpack.c.0.s8 %v953
        %v955 = vperm.slane %v951, %v954
        %v957 = vadd.f32 %v948, %v955
        %s958 = sld [smem:[#allocation4 + %s29]]
        %v959 = vstv %s958
        %v960 = vmul.f32 %v957, %v959
        %961 = vst [vmem:[%s396] sm:$0xff] %v960
        %s962 = sand.u32 %s194, 1
        %s963 = scalar_lea.sflag [#allocation6], %s962
        %s964 = sand.u32 %s194, 1
        %s965 = smul.addr %s964, 8
        %s966 = scalar_lea.vmem [#allocation15], %s965
        // Predicated region
        $region73: #{tpu_custom_call.1} parent=47 // pred_check
          %p967 = pneg %p204
        $region74: #{tpu_custom_call.1} parent=47 // pred_check_branch
          %969 = sbr.rel (%p967) target = $region76
        $region75: #{tpu_custom_call.1} parent=47 // pred_region
          %971 = vsyncadd %s963, 0
          %s972 = smul.addr %s29, 2
          %s973 = smul.addr %s972, 4
          %s974 = scalar_lea.hbm %s7, %s973
          %s976 = sshll.u32 %s966, 4
          %s977 = int_to_ptr.vmem [resolvable:$true] %s976
          %s978 = sshll.u32 %s974, 4
          %s979 = int_to_ptr.hbm [resolvable:$true] %s978
          %981 = dma.vmem_to_hbm [thread:$0]  %s977, 128, %s979, %s963
        $region76: #{tpu_custom_call.1} parent=47 // pred_fallthru
          _
      $region48: #{tpu_custom_call.1} parent=5 // pred_fallthru
        _
      %p982 = scmp.le.s32.totalorder 2, %s24
      // Predicated region
      $region77: #{tpu_custom_call.1} parent=5 // pred_check
        %p983 = pneg %p982
      $region78: #{tpu_custom_call.1} parent=5 // pred_check_branch
        %985 = sbr.rel (%p983) target = $region80
      $region79: #{tpu_custom_call.1} parent=5 // pred_region
        %s986 = ssub.s32 %s24, 2
        // Predicated region
        $region81: #{tpu_custom_call.1} parent=79 // pred_check
          %p987 = pneg %p210
        $region82: #{tpu_custom_call.1} parent=79 // pred_check_branch
          %989 = sbr.rel (%p987) target = $region84
        $region83: #{tpu_custom_call.1} parent=79 // pred_region
          %s990 = sand.u32 %s195, 1
          %s991 = scalar_lea.sflag [#allocation6], %s990
          %s992 = sand.u32 %s195, 1
          %s993 = smul.addr %s992, 8
          %s994 = scalar_lea.vmem [#allocation15], %s993
          %996 = dma.done %s991, 128
        $region84: #{tpu_custom_call.1} parent=79 // pred_fallthru
          _
      $region80: #{tpu_custom_call.1} parent=5 // pred_fallthru
        _
    $region6: #{tpu_custom_call.1} parent=1 // loop_footer
      %s28 = sadd.s32 1, %s24
    $region7: #{tpu_custom_call.1} parent=1 // loop_footer_branch
      %23 = sbr.rel target = $region3
    $region8: #{tpu_custom_call.1} parent=1 // loop_exit
      _
    %997 = vsyncpa [#allocation5], 1
    %s998 = scalar_lea.sflag [#allocation5], 1
    %999 = vsyncpa %s998, 1
    %1000 = vsyncpa [#allocation10], 1
    %1001 = vsyncpa [#allocation13], 1
    %s1002 = scalar_lea.sflag [#allocation13], 1
    %1003 = vsyncpa %s1002, 1
    %1004 = vsyncpa [#allocation6], 1
    %s1005 = scalar_lea.sflag [#allocation6], 1
    %1006 = vsyncpa %s1005, 1
    %1007 = vsyncpa [#allocation7], 1
    %s1008 = scalar_lea.sflag [#allocation7], 1
    %1009 = vsyncpa %s1008, 1

</llo_original>
